<compile_context>
chip_gen: v6e
topology: v6e:2x2x1
jax: 0.10.0
libtpu: 0.0.40
codegen_flags: <defaults>
</compile_context>

<pallas_src>
import jax
import jax.numpy as jnp
from jax.experimental import pallas as pl
from jax.experimental.pallas import tpu as pltpu


def _cast_kernel(x_ref, o_ref):
    # Elementwise cast on the whole tile (VPU / pack-unpack). Trivial compute;
    # the kernel is pure HBM streaming.
    o_ref[...] = x_ref[...].astype(o_ref.dtype)


# Tunables --------------------------------------------------------------
_LANE_CANDIDATES = (1024, 512, 256, 128)      # lane-dense slab widths
_ROW_ALIGN = 32                               # covers f32(8)/bf16(16)/int8(32) sublane packing
_MIN_GRID_STEPS = 4                           # >=2 for megacore, >=4 for pipelining
_SMALL_FASTPATH_BYTES = 1024 * 1024           # in + out bytes below which XLA convert wins
_MAX_TILE_BYTES = 16 * 1024 * 1024            # per-step (in + out) budget cap
_DEFAULT_VMEM_BYTES = 64 * 1024 * 1024        # conservative (v7x) if query fails


def _vmem_capacity_bytes():
    """Best-effort query of per-core VMEM; conservative default on failure."""
    try:
        info = pltpu.get_tpu_info()
        for name in ("vmem_capacity_bytes", "vmem_size_bytes", "vmem_bytes"):
            v = getattr(info, name, None)
            if v:
                return int(v)
    except Exception:
        pass
    return _DEFAULT_VMEM_BYTES


def _cast_2d(x2, dtype, tr, cols, vmem_limit):
    rows = x2.shape[0]
    return pl.pallas_call(
        _cast_kernel,
        out_shape=jax.ShapeDtypeStruct((rows, cols), dtype),
        grid=(pl.cdiv(rows, tr),),
        in_specs=[pl.BlockSpec((tr, cols), lambda i: (i, 0))],
        out_specs=pl.BlockSpec((tr, cols), lambda i: (i, 0)),
        compiler_params=pltpu.CompilerParams(
            dimension_semantics=("parallel",),   # megacore split on v7x, no-op on v5e/v6e
            vmem_limit_bytes=vmem_limit,
        ),
    )(x2)


def pallas_cast(x, dtype):
    """Cast `x` to `dtype` with a tiled, pipelined, lane-dense Pallas TPU kernel."""
    dtype = jnp.dtype(dtype)
    if x.dtype == dtype:
        # Same-dtype: torch `.to` returns the same tensor; mirror that.
        return x

    total = x.size
    bytes_per_elem = x.dtype.itemsize + dtype.itemsize  # input + output traffic
    if total == 0 or total * bytes_per_elem < _SMALL_FASTPATH_BYTES:
        # Tiny activations: pallas_call launch + single-step execution can't
        # beat XLA's (often fused) convert.
        return x.astype(dtype)

    orig_shape = x.shape
    x_flat = x.reshape(-1)

    # ---- choose a lane-dense 2-D slab (rows, cols) --------------------
    cols = None
    for cand in _LANE_CANDIDATES:
        if total % cand == 0:
            cols = cand
            break

    pad = 0
    if cols is None:
        # Ragged element count: pad the flat array to a 128-lane multiple so
        # every store stays a full-lane vst, then slice the pad off afterwards.
        cols = 128
        padded_total = ((total + cols - 1) // cols) * cols
        pad = padded_total - total
        x_flat = jnp.pad(x_flat, (0, pad))
    else:
        padded_total = total

    rows = padded_total // cols

    # ---- generation-aware tile sizing ----------------------------------
    vmem = _vmem_capacity_bytes()
    target_tile_bytes = min(_MAX_TILE_BYTES, vmem // 4)   # 2x tile <= vmem/2

    tr = target_tile_bytes // (cols * bytes_per_elem)
    tr = (tr // _ROW_ALIGN) * _ROW_ALIGN
    if tr < _ROW_ALIGN:
        tr = _ROW_ALIGN

    # Guarantee >= _MIN_GRID_STEPS grid steps whenever the row count allows:
    # multiple steps enable v7x's two-TC split and DMA/compute overlap.
    tr_cap = (rows // _MIN_GRID_STEPS // _ROW_ALIGN) * _ROW_ALIGN
    if tr_cap >= _ROW_ALIGN:
        tr = min(tr, tr_cap)

    if tr >= rows:
        tr = rows   # single block == full dim, always legal

    tile_bytes = tr * cols * bytes_per_elem
    # vmem_limit derived exactly from the pipeline: 2 buffers x (in+out tile)
    # + small slack for Mosaic internal scratch.
    vmem_limit = 2 * tile_bytes + 2 * 1024 * 1024
    vmem_limit = int(min(max(vmem_limit, 4 * 1024 * 1024), (vmem * 3) // 4))

    x2 = x_flat.reshape(rows, cols)
    out2 = _cast_2d(x2, dtype, tr, cols, vmem_limit)

    out_flat = out2.reshape(-1)
    if pad:
        out_flat = out_flat[:total]
    return out_flat.reshape(orig_shape)


class Cast:
    """JAX/Pallas equivalent of onmt.modules.util_class.Cast."""

    def __init__(self, dtype):
        self._dtype = jnp.dtype(dtype)

    def __call__(self, x):
        return pallas_cast(x, self._dtype)


if __name__ == "__main__":
    key = jax.random.PRNGKey(0)
    k1, k2, k3 = jax.random.split(key, 3)

    # 1) Typical small NCHW-like activation: tiny-tensor fast path.
    x_small = jax.random.normal(k1, (2, 4, 16, 16), dtype=jnp.float32)
    y_small = Cast(jnp.bfloat16)(x_small)
    jax.block_until_ready(y_small)
    assert y_small.shape == x_small.shape
    assert y_small.dtype == jnp.bfloat16
    assert jnp.array_equal(y_small, x_small.astype(jnp.bfloat16))

    # 2) Larger activation: exercises the tiled Pallas kernel
    #    (lane-dense slab, >=4-step grid, double-buffered DMA).
    x_big = jax.random.normal(k2, (8, 64, 64, 32), dtype=jnp.float32)
    y_big = Cast(jnp.bfloat16)(x_big)
    jax.block_until_ready(y_big)
    assert y_big.shape == x_big.shape
    assert y_big.dtype == jnp.bfloat16
    assert jnp.array_equal(y_big, x_big.astype(jnp.bfloat16))

    # 3) Widening cast (bf16 -> f32) through the kernel as well.
    z = Cast(jnp.float32)(y_big)
    jax.block_until_ready(z)
    assert z.dtype == jnp.float32
    assert jnp.array_equal(z, y_big.astype(jnp.float32))

    # 4) Ragged element count (not a multiple of 128): padded lane-dense path.
    x_ragged = jax.random.normal(k3, (257, 1031), dtype=jnp.float32)
    y_ragged = Cast(jnp.bfloat16)(x_ragged)
    jax.block_until_ready(y_ragged)
    assert y_ragged.shape == x_ragged.shape
    assert y_ragged.dtype == jnp.bfloat16
    assert jnp.array_equal(y_ragged, x_ragged.astype(jnp.bfloat16))

    # 5) Same-dtype path: identity, no kernel launch.
    w = Cast(jnp.float32)(z)
    jax.block_until_ready(w)
    assert w.dtype == jnp.float32
    assert jnp.array_equal(w, z)

    print("KERNEL_OK")
</pallas_src>

<mosaic_0001>
module attributes {stable_mosaic.version = 11 : i64} {
  func.func @_cast_kernel(%arg0: i32, %arg1: memref<256x1024xf32, #tpu.memory_space<vmem>>, %arg2: memref<256x1024xbf16, #tpu.memory_space<vmem>>) attributes {dimension_semantics = [#tpu.dimension_semantics<parallel>], iteration_bounds = array<i64: 4>, scalar_prefetch = 0 : i64, scratch_operands = 0 : i64, tpu.core_type = #tpu.core_type<tc>, window_params = [{transform_indices = @transform_0, window_bounds = array<i64: 256, 1024>}, {transform_indices = @transform_1, window_bounds = array<i64: 256, 1024>}]} {
    %c0 = arith.constant 0 : index
    %c0_0 = arith.constant 0 : index
    %0 = vector.load %arg1[%c0, %c0_0] : memref<256x1024xf32, #tpu.memory_space<vmem>>, vector<256x1024xf32>
    %1 = arith.truncf %0 : vector<256x1024xf32> to vector<256x1024xbf16>
    %c0_1 = arith.constant 0 : index
    %c0_2 = arith.constant 0 : index
    %2 = vector.load %arg2[%c0_1, %c0_2] : memref<256x1024xbf16, #tpu.memory_space<vmem>>, vector<256x1024xbf16>
    tpu.vector_store %arg2[%c0_1, %c0_2], %1 {strides = array<i32>} : memref<256x1024xbf16, #tpu.memory_space<vmem>>, vector<256x1024xbf16>,
    return
  }
  func.func @transform_0(%arg0: i32) -> (i32, i32) {
    %c0_i32 = arith.constant 0 : i32
    %c0_i32_0 = arith.constant 0 : i32
    return %arg0, %c0_i32 : i32, i32
  }
  func.func @transform_1(%arg0: i32) -> (i32, i32) {
    %c0_i32 = arith.constant 0 : i32
    %c0_i32_0 = arith.constant 0 : i32
    return %arg0, %c0_i32 : i32, i32
  }
}

</mosaic_0001>

<llo_original>
// kernel: tpu_custom_call.1
$region0: #{tpu_custom_call.1}
  #allocation0 [shape = 'u32[]', space=smem, size = 0x4, offset = 0x4, fixed_abs, tag = 'smem constant byte address 0x4 - core index']
  #allocation1 [shape = 'u32[144,128]{1,0:T(1,128)}', space=vmem, size = 0x12000, scoped, tag = 'internal scratch']
  %s0 = inlined_call_operand.hbm [shape: f32[1024,1024], index: 0, kind: input, shape index: {}]
  %s1 = inlined_call_operand.hbm [shape: bf16[1024,1024], index: 1, kind: output, shape index: {}]
  %s2 = sld [smem:[#allocation0]]
  $region41: #{tpu_custom_call.1} parent=0
    _
  %s4 = ssub.s32 1, %s2
  %s5 = scalar_select 0, %s4, %s2
  $region1: #{tpu_custom_call.1} parent=0
    #allocation2 [shape = 'u8[2097152]{0}', space=vmem, size = 0x200000, scoped, tag = 'input window, operand 0']
    #allocation3 [shape = 's32[2]{0}', space=sflag, size = 0x8, scoped, tag = 'scoped memory for tpu_custom_call.1']
    #allocation4 [shape = 's32[2]{0}', space=sflag, size = 0x8, scoped, tag = 'scoped memory for tpu_custom_call.1']
    #allocation5 [shape = 'u8[1048576]{0}', space=vmem, size = 0x100000, scoped, tag = 'output window, operand 0']
    %6 = vsyncpa [#allocation3], 0
    %s7 = scalar_lea.sflag [#allocation3], 1
    %8 = vsyncpa %s7, 0
    %9 = vsyncpa [#allocation4], 0
    %s10 = scalar_lea.sflag [#allocation4], 1
    %11 = vsyncpa %s10, 0
    loop: start=0, step=1, limit=6
    $region2: #{tpu_custom_call.1} parent=1 // loop_pre_header
      _
    $region3: #{tpu_custom_call.1} parent=1 // loop_header
      %s13 = sphi 0, %s17
      %p14 = scmp.ge.s32.totalorder %s13, 6
      %s23 = sphi 0, %s25
      %s26 = sphi 0, %s23
      %s27 = sphi 0, %s26
      %s43 = sphi 0, %s27
      %s49 = sphi 0, %s51
      %s52 = sphi 0, %s49
      %s53 = sphi 0, %s52
      %s69 = sphi 0, %s53
    $region4: #{tpu_custom_call.1} parent=1 // loop_header_branch
      %16 = sbr.rel (%p14) target = $region8
    $region5: #{tpu_custom_call.1} parent=1 // loop_body
      %s18 = ssub.s32 %s13, 1
      %s19 = ssub.s32 %s13, 2
      %s20 = sadd.s32 %s13, 1
      %s21 = ssub.s32 %s13, %s20
      %p22 = scmp.eq.s32.totalorder %s21, 0
      %s24 = sadd.s32 %s23, 1
      %s25 = scalar_select %p22, %s23, %s24
      %p28 = pneg %p22
      %p29 = scmp.eq.s32.totalorder %s13, 3
      %p30 = por %p28, %p29
      %p31 = scmp.ne.s32.totalorder %s23, %s26
      %p32 = scmp.eq.s32.totalorder %s13, 0
      %p33 = por %p31, %p32
      %p34 = scmp.ne.s32.totalorder %s23, %s26
      %p35 = scmp.eq.s32.totalorder %s18, 3
      %p36 = por %p34, %p35
      %p37 = scmp.ne.s32.totalorder %s26, %s27
      %p38 = scmp.eq.s32.totalorder %s18, 0
      %p39 = por %p37, %p38
      %p40 = scmp.ne.s32.totalorder %s26, %s27
      %p41 = scmp.eq.s32.totalorder %s19, 3
      %p42 = por %p40, %p41
      %p44 = scmp.ne.s32.totalorder %s27, %s43
      %p45 = scmp.eq.s32.totalorder %s19, 0
      %p46 = por %p44, %p45
      %s47 = ssub.s32 %s13, %s20
      %p48 = scmp.eq.s32.totalorder %s47, 0
      %s50 = sadd.s32 %s49, 1
      %s51 = scalar_select %p48, %s49, %s50
      %p54 = pneg %p48
      %p55 = scmp.eq.s32.totalorder %s13, 3
      %p56 = por %p54, %p55
      %p57 = scmp.ne.s32.totalorder %s49, %s52
      %p58 = scmp.eq.s32.totalorder %s13, 0
      %p59 = por %p57, %p58
      %p60 = scmp.ne.s32.totalorder %s49, %s52
      %p61 = scmp.eq.s32.totalorder %s18, 3
      %p62 = por %p60, %p61
      %p63 = scmp.ne.s32.totalorder %s52, %s53
      %p64 = scmp.eq.s32.totalorder %s18, 0
      %p65 = por %p63, %p64
      %p66 = scmp.ne.s32.totalorder %s52, %s53
      %p67 = scmp.eq.s32.totalorder %s19, 3
      %p68 = por %p66, %p67
      %p70 = scmp.ne.s32.totalorder %s53, %s69
      %p71 = scmp.eq.s32.totalorder %s19, 0
      %p72 = por %p70, %p71
      %p73 = scmp.le.s32.totalorder 1, %s13
      %p74 = scmp.lt.s32.totalorder %s13, 5
      %p75 = pnand %p73, %p74
      %p76 = pneg %p75
      // Predicated region
      $region9: #{tpu_custom_call.1} parent=5 // pred_check
        _
      $region10: #{tpu_custom_call.1} parent=5 // pred_check_branch
        %78 = sbr.rel (%p75) target = $region12
      $region11: #{tpu_custom_call.1} parent=5 // pred_region
        %s79 = ssub.s32 %s13, 1
      $region12: #{tpu_custom_call.1} parent=5 // pred_fallthru
        _
      %p80 = scmp.lt.s32.totalorder %s13, 4
      // Predicated region
      $region13: #{tpu_custom_call.1} parent=5 // pred_check
        %p81 = pneg %p80
      $region14: #{tpu_custom_call.1} parent=5 // pred_check_branch
        %83 = sbr.rel (%p81) target = $region16
      $region15: #{tpu_custom_call.1} parent=5 // pred_region
        // Predicated region
        $region17: #{tpu_custom_call.1} parent=15 // pred_check
          %p84 = pneg %p33
        $region18: #{tpu_custom_call.1} parent=15 // pred_check_branch
          %86 = sbr.rel (%p84) target = $region20
        $region19: #{tpu_custom_call.1} parent=15 // pred_region
          %s87 = sand.u32 %s23, 1
          %s88 = scalar_lea.sflag [#allocation3], %s87
          %s89 = sand.u32 %s23, 1
          %s90 = smul.addr %s89, 2048
          %s91 = scalar_lea.vmem [#allocation2], %s90
          %s92 = smul.u32 32, %s13
          %s94 = ssub.s32 32768, 32768
          %95 = vsyncadd %s88, %s94
          %s96 = smul.addr %s92, 8
          %s97 = smul.addr %s96, 128
          %s98 = scalar_lea.hbm %s0, %s97
          %s99 = sshll.u32 %s91, 4
          %s100 = int_to_ptr.vmem [resolvable:$true] %s99
          %105 = dma.hbm_to_vmem [thread:$0]  %s98, 32768, %s100, %s88, 1024, 1024, 64
        $region20: #{tpu_custom_call.1} parent=15 // pred_fallthru
          _
      $region16: #{tpu_custom_call.1} parent=5 // pred_fallthru
        _
      %p106 = scmp.le.s32.totalorder 1, %s13
      %p107 = scmp.lt.s32.totalorder %s13, 5
      %p108 = pnand %p106, %p107
      %p109 = pneg %p108
      // Predicated region
      $region21: #{tpu_custom_call.1} parent=5 // pred_check
        _
      $region22: #{tpu_custom_call.1} parent=5 // pred_check_branch
        %111 = sbr.rel (%p108) target = $region24
      $region23: #{tpu_custom_call.1} parent=5 // pred_region
        %s112 = ssub.s32 %s13, 1
        %s113 = sand.u32 %s26, 1
        %s114 = scalar_lea.sflag [#allocation3], %s113
        %s115 = sand.u32 %s26, 1
        %s116 = smul.addr %s115, 2048
        %s117 = scalar_lea.vmem [#allocation2], %s116
        // Predicated region
        $region25: #{tpu_custom_call.1} parent=23 // pred_check
          %p118 = pneg %p39
        $region26: #{tpu_custom_call.1} parent=23 // pred_check_branch
          %120 = sbr.rel (%p118) target = $region28
        $region27: #{tpu_custom_call.1} parent=23 // pred_region
          %121 = dma.done %s114, 32768
        $region28: #{tpu_custom_call.1} parent=23 // pred_fallthru
          _
        %s122 = sand.u32 %s26, 1
        %s123 = scalar_lea.sflag [#allocation3], %s122
        %s124 = sand.u32 %s26, 1
        %s125 = smul.addr %s124, 2048
        %s126 = scalar_lea.vmem [#allocation2], %s125
        %p127 = pneg %p39
        %p128 = pneg %p36
        %p129 = pneg %p65
        %p130 = pneg %p62
        %s131 = sand.u32 %s52, 1
        %s132 = scalar_lea.sflag [#allocation4], %s131
        %s133 = sand.u32 %s52, 1
        %s134 = smul.addr %s133, 1024
        %s135 = scalar_lea.vmem [#allocation5], %s134
        %s136 = smul.u32 32, %s18
        %s137 = smul.u32 32, %s18
        %v138 = vld [vmem:[%s117] sm:$0xff]
        %v139 = vld [vmem:[%s117 + $0x8] sm:$0xff]
        %v140 = vld [vmem:[%s117 + $0x10] sm:$0xff]
        %v141 = vld [vmem:[%s117 + $0x18] sm:$0xff]
        %v142 = vld [vmem:[%s117 + $0x20] sm:$0xff]
        %v143 = vld [vmem:[%s117 + $0x28] sm:$0xff]
        %v144 = vld [vmem:[%s117 + $0x30] sm:$0xff]
        %v145 = vld [vmem:[%s117 + $0x38] sm:$0xff]
        %v146 = vld [vmem:[%s117 + $0x40] sm:$0xff]
        %v147 = vld [vmem:[%s117 + $0x48] sm:$0xff]
        %v148 = vld [vmem:[%s117 + $0x50] sm:$0xff]
        %v149 = vld [vmem:[%s117 + $0x58] sm:$0xff]
        %v150 = vld [vmem:[%s117 + $0x60] sm:$0xff]
        %v151 = vld [vmem:[%s117 + $0x68] sm:$0xff]
        %v152 = vld [vmem:[%s117 + $0x70] sm:$0xff]
        %v153 = vld [vmem:[%s117 + $0x78] sm:$0xff]
        %v154 = vld [vmem:[%s117 + $0x80] sm:$0xff]
        %v155 = vld [vmem:[%s117 + $0x88] sm:$0xff]
        %v156 = vld [vmem:[%s117 + $0x90] sm:$0xff]
        %v157 = vld [vmem:[%s117 + $0x98] sm:$0xff]
        %v158 = vld [vmem:[%s117 + $0xa0] sm:$0xff]
        %v159 = vld [vmem:[%s117 + $0xa8] sm:$0xff]
        %v160 = vld [vmem:[%s117 + $0xb0] sm:$0xff]
        %v161 = vld [vmem:[%s117 + $0xb8] sm:$0xff]
        %v162 = vld [vmem:[%s117 + $0xc0] sm:$0xff]
        %v163 = vld [vmem:[%s117 + $0xc8] sm:$0xff]
        %v164 = vld [vmem:[%s117 + $0xd0] sm:$0xff]
        %v165 = vld [vmem:[%s117 + $0xd8] sm:$0xff]
        %v166 = vld [vmem:[%s117 + $0xe0] sm:$0xff]
        %v167 = vld [vmem:[%s117 + $0xe8] sm:$0xff]
        %v168 = vld [vmem:[%s117 + $0xf0] sm:$0xff]
        %v169 = vld [vmem:[%s117 + $0xf8] sm:$0xff]
        %v170 = vld [vmem:[%s117 + $0x100] sm:$0xff]
        %v171 = vld [vmem:[%s117 + $0x108] sm:$0xff]
        %v172 = vld [vmem:[%s117 + $0x110] sm:$0xff]
        %v173 = vld [vmem:[%s117 + $0x118] sm:$0xff]
        %v174 = vld [vmem:[%s117 + $0x120] sm:$0xff]
        %v175 = vld [vmem:[%s117 + $0x128] sm:$0xff]
        %v176 = vld [vmem:[%s117 + $0x130] sm:$0xff]
        %v177 = vld [vmem:[%s117 + $0x138] sm:$0xff]
        %v178 = vld [vmem:[%s117 + $0x140] sm:$0xff]
        %v179 = vld [vmem:[%s117 + $0x148] sm:$0xff]
        %v180 = vld [vmem:[%s117 + $0x150] sm:$0xff]
        %v181 = vld [vmem:[%s117 + $0x158] sm:$0xff]
        %v182 = vld [vmem:[%s117 + $0x160] sm:$0xff]
        %v183 = vld [vmem:[%s117 + $0x168] sm:$0xff]
        %v184 = vld [vmem:[%s117 + $0x170] sm:$0xff]
        %v185 = vld [vmem:[%s117 + $0x178] sm:$0xff]
        %v186 = vld [vmem:[%s117 + $0x180] sm:$0xff]
        %v187 = vld [vmem:[%s117 + $0x188] sm:$0xff]
        %v188 = vld [vmem:[%s117 + $0x190] sm:$0xff]
        %v189 = vld [vmem:[%s117 + $0x198] sm:$0xff]
        %v190 = vld [vmem:[%s117 + $0x1a0] sm:$0xff]
        %v191 = vld [vmem:[%s117 + $0x1a8] sm:$0xff]
        %v192 = vld [vmem:[%s117 + $0x1b0] sm:$0xff]
        %v193 = vld [vmem:[%s117 + $0x1b8] sm:$0xff]
        %v194 = vld [vmem:[%s117 + $0x1c0] sm:$0xff]
        %v195 = vld [vmem:[%s117 + $0x1c8] sm:$0xff]
        %v196 = vld [vmem:[%s117 + $0x1d0] sm:$0xff]
        %v197 = vld [vmem:[%s117 + $0x1d8] sm:$0xff]
        %v198 = vld [vmem:[%s117 + $0x1e0] sm:$0xff]
        %v199 = vld [vmem:[%s117 + $0x1e8] sm:$0xff]
        %v200 = vld [vmem:[%s117 + $0x1f0] sm:$0xff]
        %v201 = vld [vmem:[%s117 + $0x1f8] sm:$0xff]
        %v202 = vld [vmem:[%s117 + $0x200] sm:$0xff]
        %v203 = vld [vmem:[%s117 + $0x208] sm:$0xff]
        %v204 = vld [vmem:[%s117 + $0x210] sm:$0xff]
        %v205 = vld [vmem:[%s117 + $0x218] sm:$0xff]
        %v206 = vld [vmem:[%s117 + $0x220] sm:$0xff]
        %v207 = vld [vmem:[%s117 + $0x228] sm:$0xff]
        %v208 = vld [vmem:[%s117 + $0x230] sm:$0xff]
        %v209 = vld [vmem:[%s117 + $0x238] sm:$0xff]
        %v210 = vld [vmem:[%s117 + $0x240] sm:$0xff]
        %v211 = vld [vmem:[%s117 + $0x248] sm:$0xff]
        %v212 = vld [vmem:[%s117 + $0x250] sm:$0xff]
        %v213 = vld [vmem:[%s117 + $0x258] sm:$0xff]
        %v214 = vld [vmem:[%s117 + $0x260] sm:$0xff]
        %v215 = vld [vmem:[%s117 + $0x268] sm:$0xff]
        %v216 = vld [vmem:[%s117 + $0x270] sm:$0xff]
        %v217 = vld [vmem:[%s117 + $0x278] sm:$0xff]
        %v218 = vld [vmem:[%s117 + $0x280] sm:$0xff]
        %v219 = vld [vmem:[%s117 + $0x288] sm:$0xff]
        %v220 = vld [vmem:[%s117 + $0x290] sm:$0xff]
        %v221 = vld [vmem:[%s117 + $0x298] sm:$0xff]
        %v222 = vld [vmem:[%s117 + $0x2a0] sm:$0xff]
        %v223 = vld [vmem:[%s117 + $0x2a8] sm:$0xff]
        %v224 = vld [vmem:[%s117 + $0x2b0] sm:$0xff]
        %v225 = vld [vmem:[%s117 + $0x2b8] sm:$0xff]
        %v226 = vld [vmem:[%s117 + $0x2c0] sm:$0xff]
        %v227 = vld [vmem:[%s117 + $0x2c8] sm:$0xff]
        %v228 = vld [vmem:[%s117 + $0x2d0] sm:$0xff]
        %v229 = vld [vmem:[%s117 + $0x2d8] sm:$0xff]
        %v230 = vld [vmem:[%s117 + $0x2e0] sm:$0xff]
        %v231 = vld [vmem:[%s117 + $0x2e8] sm:$0xff]
        %v232 = vld [vmem:[%s117 + $0x2f0] sm:$0xff]
        %v233 = vld [vmem:[%s117 + $0x2f8] sm:$0xff]
        %v234 = vld [vmem:[%s117 + $0x300] sm:$0xff]
        %v235 = vld [vmem:[%s117 + $0x308] sm:$0xff]
        %v236 = vld [vmem:[%s117 + $0x310] sm:$0xff]
        %v237 = vld [vmem:[%s117 + $0x318] sm:$0xff]
        %v238 = vld [vmem:[%s117 + $0x320] sm:$0xff]
        %v239 = vld [vmem:[%s117 + $0x328] sm:$0xff]
        %v240 = vld [vmem:[%s117 + $0x330] sm:$0xff]
        %v241 = vld [vmem:[%s117 + $0x338] sm:$0xff]
        %v242 = vld [vmem:[%s117 + $0x340] sm:$0xff]
        %v243 = vld [vmem:[%s117 + $0x348] sm:$0xff]
        %v244 = vld [vmem:[%s117 + $0x350] sm:$0xff]
        %v245 = vld [vmem:[%s117 + $0x358] sm:$0xff]
        %v246 = vld [vmem:[%s117 + $0x360] sm:$0xff]
        %v247 = vld [vmem:[%s117 + $0x368] sm:$0xff]
        %v248 = vld [vmem:[%s117 + $0x370] sm:$0xff]
        %v249 = vld [vmem:[%s117 + $0x378] sm:$0xff]
        %v250 = vld [vmem:[%s117 + $0x380] sm:$0xff]
        %v251 = vld [vmem:[%s117 + $0x388] sm:$0xff]
        %v252 = vld [vmem:[%s117 + $0x390] sm:$0xff]
        %v253 = vld [vmem:[%s117 + $0x398] sm:$0xff]
        %v254 = vld [vmem:[%s117 + $0x3a0] sm:$0xff]
        %v255 = vld [vmem:[%s117 + $0x3a8] sm:$0xff]
        %v256 = vld [vmem:[%s117 + $0x3b0] sm:$0xff]
        %v257 = vld [vmem:[%s117 + $0x3b8] sm:$0xff]
        %v258 = vld [vmem:[%s117 + $0x3c0] sm:$0xff]
        %v259 = vld [vmem:[%s117 + $0x3c8] sm:$0xff]
        %v260 = vld [vmem:[%s117 + $0x3d0] sm:$0xff]
        %v261 = vld [vmem:[%s117 + $0x3d8] sm:$0xff]
        %v262 = vld [vmem:[%s117 + $0x3e0] sm:$0xff]
        %v263 = vld [vmem:[%s117 + $0x3e8] sm:$0xff]
        %v264 = vld [vmem:[%s117 + $0x3f0] sm:$0xff]
        %v265 = vld [vmem:[%s117 + $0x3f8] sm:$0xff]
        %v266 = vld [vmem:[%s117 + $0x400] sm:$0xff]
        %v267 = vld [vmem:[%s117 + $0x408] sm:$0xff]
        %v268 = vld [vmem:[%s117 + $0x410] sm:$0xff]
        %v269 = vld [vmem:[%s117 + $0x418] sm:$0xff]
        %v270 = vld [vmem:[%s117 + $0x420] sm:$0xff]
        %v271 = vld [vmem:[%s117 + $0x428] sm:$0xff]
        %v272 = vld [vmem:[%s117 + $0x430] sm:$0xff]
        %v273 = vld [vmem:[%s117 + $0x438] sm:$0xff]
        %v274 = vld [vmem:[%s117 + $0x440] sm:$0xff]
        %v275 = vld [vmem:[%s117 + $0x448] sm:$0xff]
        %v276 = vld [vmem:[%s117 + $0x450] sm:$0xff]
        %v277 = vld [vmem:[%s117 + $0x458] sm:$0xff]
        %v278 = vld [vmem:[%s117 + $0x460] sm:$0xff]
        %v279 = vld [vmem:[%s117 + $0x468] sm:$0xff]
        %v280 = vld [vmem:[%s117 + $0x470] sm:$0xff]
        %v281 = vld [vmem:[%s117 + $0x478] sm:$0xff]
        %v282 = vld [vmem:[%s117 + $0x480] sm:$0xff]
        %v283 = vld [vmem:[%s117 + $0x488] sm:$0xff]
        %v284 = vld [vmem:[%s117 + $0x490] sm:$0xff]
        %v285 = vld [vmem:[%s117 + $0x498] sm:$0xff]
        %v286 = vld [vmem:[%s117 + $0x4a0] sm:$0xff]
        %v287 = vld [vmem:[%s117 + $0x4a8] sm:$0xff]
        %v288 = vld [vmem:[%s117 + $0x4b0] sm:$0xff]
        %v289 = vld [vmem:[%s117 + $0x4b8] sm:$0xff]
        %v290 = vld [vmem:[%s117 + $0x4c0] sm:$0xff]
        %v291 = vld [vmem:[%s117 + $0x4c8] sm:$0xff]
        %v292 = vld [vmem:[%s117 + $0x4d0] sm:$0xff]
        %v293 = vld [vmem:[%s117 + $0x4d8] sm:$0xff]
        %v294 = vld [vmem:[%s117 + $0x4e0] sm:$0xff]
        %v295 = vld [vmem:[%s117 + $0x4e8] sm:$0xff]
        %v296 = vld [vmem:[%s117 + $0x4f0] sm:$0xff]
        %v297 = vld [vmem:[%s117 + $0x4f8] sm:$0xff]
        %v298 = vld [vmem:[%s117 + $0x500] sm:$0xff]
        %v299 = vld [vmem:[%s117 + $0x508] sm:$0xff]
        %v300 = vld [vmem:[%s117 + $0x510] sm:$0xff]
        %v301 = vld [vmem:[%s117 + $0x518] sm:$0xff]
        %v302 = vld [vmem:[%s117 + $0x520] sm:$0xff]
        %v303 = vld [vmem:[%s117 + $0x528] sm:$0xff]
        %v304 = vld [vmem:[%s117 + $0x530] sm:$0xff]
        %v305 = vld [vmem:[%s117 + $0x538] sm:$0xff]
        %v306 = vld [vmem:[%s117 + $0x540] sm:$0xff]
        %v307 = vld [vmem:[%s117 + $0x548] sm:$0xff]
        %v308 = vld [vmem:[%s117 + $0x550] sm:$0xff]
        %v309 = vld [vmem:[%s117 + $0x558] sm:$0xff]
        %v310 = vld [vmem:[%s117 + $0x560] sm:$0xff]
        %v311 = vld [vmem:[%s117 + $0x568] sm:$0xff]
        %v312 = vld [vmem:[%s117 + $0x570] sm:$0xff]
        %v313 = vld [vmem:[%s117 + $0x578] sm:$0xff]
        %v314 = vld [vmem:[%s117 + $0x580] sm:$0xff]
        %v315 = vld [vmem:[%s117 + $0x588] sm:$0xff]
        %v316 = vld [vmem:[%s117 + $0x590] sm:$0xff]
        %v317 = vld [vmem:[%s117 + $0x598] sm:$0xff]
        %v318 = vld [vmem:[%s117 + $0x5a0] sm:$0xff]
        %v319 = vld [vmem:[%s117 + $0x5a8] sm:$0xff]
        %v320 = vld [vmem:[%s117 + $0x5b0] sm:$0xff]
        %v321 = vld [vmem:[%s117 + $0x5b8] sm:$0xff]
        %v322 = vld [vmem:[%s117 + $0x5c0] sm:$0xff]
        %v323 = vld [vmem:[%s117 + $0x5c8] sm:$0xff]
        %v324 = vld [vmem:[%s117 + $0x5d0] sm:$0xff]
        %v325 = vld [vmem:[%s117 + $0x5d8] sm:$0xff]
        %v326 = vld [vmem:[%s117 + $0x5e0] sm:$0xff]
        %v327 = vld [vmem:[%s117 + $0x5e8] sm:$0xff]
        %v328 = vld [vmem:[%s117 + $0x5f0] sm:$0xff]
        %v329 = vld [vmem:[%s117 + $0x5f8] sm:$0xff]
        %v330 = vld [vmem:[%s117 + $0x600] sm:$0xff]
        %v331 = vld [vmem:[%s117 + $0x608] sm:$0xff]
        %v332 = vld [vmem:[%s117 + $0x610] sm:$0xff]
        %v333 = vld [vmem:[%s117 + $0x618] sm:$0xff]
        %v334 = vld [vmem:[%s117 + $0x620] sm:$0xff]
        %v335 = vld [vmem:[%s117 + $0x628] sm:$0xff]
        %v336 = vld [vmem:[%s117 + $0x630] sm:$0xff]
        %v337 = vld [vmem:[%s117 + $0x638] sm:$0xff]
        %v338 = vld [vmem:[%s117 + $0x640] sm:$0xff]
        %v339 = vld [vmem:[%s117 + $0x648] sm:$0xff]
        %v340 = vld [vmem:[%s117 + $0x650] sm:$0xff]
        %v341 = vld [vmem:[%s117 + $0x658] sm:$0xff]
        %v342 = vld [vmem:[%s117 + $0x660] sm:$0xff]
        %v343 = vld [vmem:[%s117 + $0x668] sm:$0xff]
        %v344 = vld [vmem:[%s117 + $0x670] sm:$0xff]
        %v345 = vld [vmem:[%s117 + $0x678] sm:$0xff]
        %v346 = vld [vmem:[%s117 + $0x680] sm:$0xff]
        %v347 = vld [vmem:[%s117 + $0x688] sm:$0xff]
        %v348 = vld [vmem:[%s117 + $0x690] sm:$0xff]
        %v349 = vld [vmem:[%s117 + $0x698] sm:$0xff]
        %v350 = vld [vmem:[%s117 + $0x6a0] sm:$0xff]
        %v351 = vld [vmem:[%s117 + $0x6a8] sm:$0xff]
        %v352 = vld [vmem:[%s117 + $0x6b0] sm:$0xff]
        %v353 = vld [vmem:[%s117 + $0x6b8] sm:$0xff]
        %v354 = vld [vmem:[%s117 + $0x6c0] sm:$0xff]
        %v355 = vld [vmem:[%s117 + $0x6c8] sm:$0xff]
        %v356 = vld [vmem:[%s117 + $0x6d0] sm:$0xff]
        %v357 = vld [vmem:[%s117 + $0x6d8] sm:$0xff]
        %v358 = vld [vmem:[%s117 + $0x6e0] sm:$0xff]
        %v359 = vld [vmem:[%s117 + $0x6e8] sm:$0xff]
        %v360 = vld [vmem:[%s117 + $0x6f0] sm:$0xff]
        %v361 = vld [vmem:[%s117 + $0x6f8] sm:$0xff]
        %v362 = vld [vmem:[%s117 + $0x700] sm:$0xff]
        %v363 = vld [vmem:[%s117 + $0x708] sm:$0xff]
        %v364 = vld [vmem:[%s117 + $0x710] sm:$0xff]
        %v365 = vld [vmem:[%s117 + $0x718] sm:$0xff]
        %v366 = vld [vmem:[%s117 + $0x720] sm:$0xff]
        %v367 = vld [vmem:[%s117 + $0x728] sm:$0xff]
        %v368 = vld [vmem:[%s117 + $0x730] sm:$0xff]
        %v369 = vld [vmem:[%s117 + $0x738] sm:$0xff]
        %v370 = vld [vmem:[%s117 + $0x740] sm:$0xff]
        %v371 = vld [vmem:[%s117 + $0x748] sm:$0xff]
        %v372 = vld [vmem:[%s117 + $0x750] sm:$0xff]
        %v373 = vld [vmem:[%s117 + $0x758] sm:$0xff]
        %v374 = vld [vmem:[%s117 + $0x760] sm:$0xff]
        %v375 = vld [vmem:[%s117 + $0x768] sm:$0xff]
        %v376 = vld [vmem:[%s117 + $0x770] sm:$0xff]
        %v377 = vld [vmem:[%s117 + $0x778] sm:$0xff]
        %v378 = vld [vmem:[%s117 + $0x780] sm:$0xff]
        %v379 = vld [vmem:[%s117 + $0x788] sm:$0xff]
        %v380 = vld [vmem:[%s117 + $0x790] sm:$0xff]
        %v381 = vld [vmem:[%s117 + $0x798] sm:$0xff]
        %v382 = vld [vmem:[%s117 + $0x7a0] sm:$0xff]
        %v383 = vld [vmem:[%s117 + $0x7a8] sm:$0xff]
        %v384 = vld [vmem:[%s117 + $0x7b0] sm:$0xff]
        %v385 = vld [vmem:[%s117 + $0x7b8] sm:$0xff]
        %v386 = vld [vmem:[%s117 + $0x7c0] sm:$0xff]
        %v387 = vld [vmem:[%s117 + $0x7c8] sm:$0xff]
        %v388 = vld [vmem:[%s117 + $0x7d0] sm:$0xff]
        %v389 = vld [vmem:[%s117 + $0x7d8] sm:$0xff]
        %v390 = vld [vmem:[%s117 + $0x7e0] sm:$0xff]
        %v391 = vld [vmem:[%s117 + $0x7e8] sm:$0xff]
        %v392 = vld [vmem:[%s117 + $0x7f0] sm:$0xff]
        %v393 = vld [vmem:[%s117 + $0x7f8] sm:$0xff]
        %v394 = vpack.c.bf16 %v146, %v138
        %v395 = vpack.c.bf16 %v147, %v139
        %v396 = vpack.c.bf16 %v148, %v140
        %v397 = vpack.c.bf16 %v149, %v141
        %v398 = vpack.c.bf16 %v150, %v142
        %v399 = vpack.c.bf16 %v151, %v143
        %v400 = vpack.c.bf16 %v152, %v144
        %v401 = vpack.c.bf16 %v153, %v145
        %v402 = vpack.c.bf16 %v162, %v154
        %v403 = vpack.c.bf16 %v163, %v155
        %v404 = vpack.c.bf16 %v164, %v156
        %v405 = vpack.c.bf16 %v165, %v157
        %v406 = vpack.c.bf16 %v166, %v158
        %v407 = vpack.c.bf16 %v167, %v159
        %v408 = vpack.c.bf16 %v168, %v160
        %v409 = vpack.c.bf16 %v169, %v161
        %v410 = vpack.c.bf16 %v178, %v170
        %v411 = vpack.c.bf16 %v179, %v171
        %v412 = vpack.c.bf16 %v180, %v172
        %v413 = vpack.c.bf16 %v181, %v173
        %v414 = vpack.c.bf16 %v182, %v174
        %v415 = vpack.c.bf16 %v183, %v175
        %v416 = vpack.c.bf16 %v184, %v176
        %v417 = vpack.c.bf16 %v185, %v177
        %v418 = vpack.c.bf16 %v194, %v186
        %v419 = vpack.c.bf16 %v195, %v187
        %v420 = vpack.c.bf16 %v196, %v188
        %v421 = vpack.c.bf16 %v197, %v189
        %v422 = vpack.c.bf16 %v198, %v190
        %v423 = vpack.c.bf16 %v199, %v191
        %v424 = vpack.c.bf16 %v200, %v192
        %v425 = vpack.c.bf16 %v201, %v193
        %v426 = vpack.c.bf16 %v210, %v202
        %v427 = vpack.c.bf16 %v211, %v203
        %v428 = vpack.c.bf16 %v212, %v204
        %v429 = vpack.c.bf16 %v213, %v205
        %v430 = vpack.c.bf16 %v214, %v206
        %v431 = vpack.c.bf16 %v215, %v207
        %v432 = vpack.c.bf16 %v216, %v208
        %v433 = vpack.c.bf16 %v217, %v209
        %v434 = vpack.c.bf16 %v226, %v218
        %v435 = vpack.c.bf16 %v227, %v219
        %v436 = vpack.c.bf16 %v228, %v220
        %v437 = vpack.c.bf16 %v229, %v221
        %v438 = vpack.c.bf16 %v230, %v222
        %v439 = vpack.c.bf16 %v231, %v223
        %v440 = vpack.c.bf16 %v232, %v224
        %v441 = vpack.c.bf16 %v233, %v225
        %v442 = vpack.c.bf16 %v242, %v234
        %v443 = vpack.c.bf16 %v243, %v235
        %v444 = vpack.c.bf16 %v244, %v236
        %v445 = vpack.c.bf16 %v245, %v237
        %v446 = vpack.c.bf16 %v246, %v238
        %v447 = vpack.c.bf16 %v247, %v239
        %v448 = vpack.c.bf16 %v248, %v240
        %v449 = vpack.c.bf16 %v249, %v241
        %v450 = vpack.c.bf16 %v258, %v250
        %v451 = vpack.c.bf16 %v259, %v251
        %v452 = vpack.c.bf16 %v260, %v252
        %v453 = vpack.c.bf16 %v261, %v253
        %v454 = vpack.c.bf16 %v262, %v254
        %v455 = vpack.c.bf16 %v263, %v255
        %v456 = vpack.c.bf16 %v264, %v256
        %v457 = vpack.c.bf16 %v265, %v257
        %v458 = vpack.c.bf16 %v274, %v266
        %v459 = vpack.c.bf16 %v275, %v267
        %v460 = vpack.c.bf16 %v276, %v268
        %v461 = vpack.c.bf16 %v277, %v269
        %v462 = vpack.c.bf16 %v278, %v270
        %v463 = vpack.c.bf16 %v279, %v271
        %v464 = vpack.c.bf16 %v280, %v272
        %v465 = vpack.c.bf16 %v281, %v273
        %v466 = vpack.c.bf16 %v290, %v282
        %v467 = vpack.c.bf16 %v291, %v283
        %v468 = vpack.c.bf16 %v292, %v284
        %v469 = vpack.c.bf16 %v293, %v285
        %v470 = vpack.c.bf16 %v294, %v286
        %v471 = vpack.c.bf16 %v295, %v287
        %v472 = vpack.c.bf16 %v296, %v288
        %v473 = vpack.c.bf16 %v297, %v289
        %v474 = vpack.c.bf16 %v306, %v298
        %v475 = vpack.c.bf16 %v307, %v299
        %v476 = vpack.c.bf16 %v308, %v300
        %v477 = vpack.c.bf16 %v309, %v301
        %v478 = vpack.c.bf16 %v310, %v302
        %v479 = vpack.c.bf16 %v311, %v303
        %v480 = vpack.c.bf16 %v312, %v304
        %v481 = vpack.c.bf16 %v313, %v305
        %v482 = vpack.c.bf16 %v322, %v314
        %v483 = vpack.c.bf16 %v323, %v315
        %v484 = vpack.c.bf16 %v324, %v316
        %v485 = vpack.c.bf16 %v325, %v317
        %v486 = vpack.c.bf16 %v326, %v318
        %v487 = vpack.c.bf16 %v327, %v319
        %v488 = vpack.c.bf16 %v328, %v320
        %v489 = vpack.c.bf16 %v329, %v321
        %v490 = vpack.c.bf16 %v338, %v330
        %v491 = vpack.c.bf16 %v339, %v331
        %v492 = vpack.c.bf16 %v340, %v332
        %v493 = vpack.c.bf16 %v341, %v333
        %v494 = vpack.c.bf16 %v342, %v334
        %v495 = vpack.c.bf16 %v343, %v335
        %v496 = vpack.c.bf16 %v344, %v336
        %v497 = vpack.c.bf16 %v345, %v337
        %v498 = vpack.c.bf16 %v354, %v346
        %v499 = vpack.c.bf16 %v355, %v347
        %v500 = vpack.c.bf16 %v356, %v348
        %v501 = vpack.c.bf16 %v357, %v349
        %v502 = vpack.c.bf16 %v358, %v350
        %v503 = vpack.c.bf16 %v359, %v351
        %v504 = vpack.c.bf16 %v360, %v352
        %v505 = vpack.c.bf16 %v361, %v353
        %v506 = vpack.c.bf16 %v370, %v362
        %v507 = vpack.c.bf16 %v371, %v363
        %v508 = vpack.c.bf16 %v372, %v364
        %v509 = vpack.c.bf16 %v373, %v365
        %v510 = vpack.c.bf16 %v374, %v366
        %v511 = vpack.c.bf16 %v375, %v367
        %v512 = vpack.c.bf16 %v376, %v368
        %v513 = vpack.c.bf16 %v377, %v369
        %v514 = vpack.c.bf16 %v386, %v378
        %v515 = vpack.c.bf16 %v387, %v379
        %v516 = vpack.c.bf16 %v388, %v380
        %v517 = vpack.c.bf16 %v389, %v381
        %v518 = vpack.c.bf16 %v390, %v382
        %v519 = vpack.c.bf16 %v391, %v383
        %v520 = vpack.c.bf16 %v392, %v384
        %v521 = vpack.c.bf16 %v393, %v385
        %v650 = vunpack.c.l.b16 %v394
        %v651 = vunpack.c.l.b16 %v395
        %v652 = vunpack.c.l.b16 %v396
        %v653 = vunpack.c.l.b16 %v397
        %v654 = vunpack.c.l.b16 %v398
        %v655 = vunpack.c.l.b16 %v399
        %v656 = vunpack.c.l.b16 %v400
        %v657 = vunpack.c.l.b16 %v401
        %v658 = vunpack.c.h.b16 %v394
        %v659 = vunpack.c.h.b16 %v395
        %v660 = vunpack.c.h.b16 %v396
        %v661 = vunpack.c.h.b16 %v397
        %v662 = vunpack.c.h.b16 %v398
        %v663 = vunpack.c.h.b16 %v399
        %v664 = vunpack.c.h.b16 %v400
        %v665 = vunpack.c.h.b16 %v401
        %v666 = vunpack.c.l.b16 %v402
        %v667 = vunpack.c.l.b16 %v403
        %v668 = vunpack.c.l.b16 %v404
        %v669 = vunpack.c.l.b16 %v405
        %v670 = vunpack.c.l.b16 %v406
        %v671 = vunpack.c.l.b16 %v407
        %v672 = vunpack.c.l.b16 %v408
        %v673 = vunpack.c.l.b16 %v409
        %v674 = vunpack.c.h.b16 %v402
        %v675 = vunpack.c.h.b16 %v403
        %v676 = vunpack.c.h.b16 %v404
        %v677 = vunpack.c.h.b16 %v405
        %v678 = vunpack.c.h.b16 %v406
        %v679 = vunpack.c.h.b16 %v407
        %v680 = vunpack.c.h.b16 %v408
        %v681 = vunpack.c.h.b16 %v409
        %v682 = vunpack.c.l.b16 %v410
        %v683 = vunpack.c.l.b16 %v411
        %v684 = vunpack.c.l.b16 %v412
        %v685 = vunpack.c.l.b16 %v413
        %v686 = vunpack.c.l.b16 %v414
        %v687 = vunpack.c.l.b16 %v415
        %v688 = vunpack.c.l.b16 %v416
        %v689 = vunpack.c.l.b16 %v417
        %v690 = vunpack.c.h.b16 %v410
        %v691 = vunpack.c.h.b16 %v411
        %v692 = vunpack.c.h.b16 %v412
        %v693 = vunpack.c.h.b16 %v413
        %v694 = vunpack.c.h.b16 %v414
        %v695 = vunpack.c.h.b16 %v415
        %v696 = vunpack.c.h.b16 %v416
        %v697 = vunpack.c.h.b16 %v417
        %v698 = vunpack.c.l.b16 %v418
        %v699 = vunpack.c.l.b16 %v419
        %v700 = vunpack.c.l.b16 %v420
        %v701 = vunpack.c.l.b16 %v421
        %v702 = vunpack.c.l.b16 %v422
        %v703 = vunpack.c.l.b16 %v423
        %v704 = vunpack.c.l.b16 %v424
        %v705 = vunpack.c.l.b16 %v425
        %v706 = vunpack.c.h.b16 %v418
        %v707 = vunpack.c.h.b16 %v419
        %v708 = vunpack.c.h.b16 %v420
        %v709 = vunpack.c.h.b16 %v421
        %v710 = vunpack.c.h.b16 %v422
        %v711 = vunpack.c.h.b16 %v423
        %v712 = vunpack.c.h.b16 %v424
        %v713 = vunpack.c.h.b16 %v425
        %v714 = vunpack.c.l.b16 %v426
        %v715 = vunpack.c.l.b16 %v427
        %v716 = vunpack.c.l.b16 %v428
        %v717 = vunpack.c.l.b16 %v429
        %v718 = vunpack.c.l.b16 %v430
        %v719 = vunpack.c.l.b16 %v431
        %v720 = vunpack.c.l.b16 %v432
        %v721 = vunpack.c.l.b16 %v433
        %v722 = vunpack.c.h.b16 %v426
        %v723 = vunpack.c.h.b16 %v427
        %v724 = vunpack.c.h.b16 %v428
        %v725 = vunpack.c.h.b16 %v429
        %v726 = vunpack.c.h.b16 %v430
        %v727 = vunpack.c.h.b16 %v431
        %v728 = vunpack.c.h.b16 %v432
        %v729 = vunpack.c.h.b16 %v433
        %v730 = vunpack.c.l.b16 %v434
        %v731 = vunpack.c.l.b16 %v435
        %v732 = vunpack.c.l.b16 %v436
        %v733 = vunpack.c.l.b16 %v437
        %v734 = vunpack.c.l.b16 %v438
        %v735 = vunpack.c.l.b16 %v439
        %v736 = vunpack.c.l.b16 %v440
        %v737 = vunpack.c.l.b16 %v441
        %v738 = vunpack.c.h.b16 %v434
        %v739 = vunpack.c.h.b16 %v435
        %v740 = vunpack.c.h.b16 %v436
        %v741 = vunpack.c.h.b16 %v437
        %v742 = vunpack.c.h.b16 %v438
        %v743 = vunpack.c.h.b16 %v439
        %v744 = vunpack.c.h.b16 %v440
        %v745 = vunpack.c.h.b16 %v441
        %v746 = vunpack.c.l.b16 %v442
        %v747 = vunpack.c.l.b16 %v443
        %v748 = vunpack.c.l.b16 %v444
        %v749 = vunpack.c.l.b16 %v445
        %v750 = vunpack.c.l.b16 %v446
        %v751 = vunpack.c.l.b16 %v447
        %v752 = vunpack.c.l.b16 %v448
        %v753 = vunpack.c.l.b16 %v449
        %v754 = vunpack.c.h.b16 %v442
        %v755 = vunpack.c.h.b16 %v443
        %v756 = vunpack.c.h.b16 %v444
        %v757 = vunpack.c.h.b16 %v445
        %v758 = vunpack.c.h.b16 %v446
        %v759 = vunpack.c.h.b16 %v447
        %v760 = vunpack.c.h.b16 %v448
        %v761 = vunpack.c.h.b16 %v449
        %v762 = vunpack.c.l.b16 %v450
        %v763 = vunpack.c.l.b16 %v451
        %v764 = vunpack.c.l.b16 %v452
        %v765 = vunpack.c.l.b16 %v453
        %v766 = vunpack.c.l.b16 %v454
        %v767 = vunpack.c.l.b16 %v455
        %v768 = vunpack.c.l.b16 %v456
        %v769 = vunpack.c.l.b16 %v457
        %v770 = vunpack.c.h.b16 %v450
        %v771 = vunpack.c.h.b16 %v451
        %v772 = vunpack.c.h.b16 %v452
        %v773 = vunpack.c.h.b16 %v453
        %v774 = vunpack.c.h.b16 %v454
        %v775 = vunpack.c.h.b16 %v455
        %v776 = vunpack.c.h.b16 %v456
        %v777 = vunpack.c.h.b16 %v457
        %v778 = vunpack.c.l.b16 %v458
        %v779 = vunpack.c.l.b16 %v459
        %v780 = vunpack.c.l.b16 %v460
        %v781 = vunpack.c.l.b16 %v461
        %v782 = vunpack.c.l.b16 %v462
        %v783 = vunpack.c.l.b16 %v463
        %v784 = vunpack.c.l.b16 %v464
        %v785 = vunpack.c.l.b16 %v465
        %v786 = vunpack.c.h.b16 %v458
        %v787 = vunpack.c.h.b16 %v459
        %v788 = vunpack.c.h.b16 %v460
        %v789 = vunpack.c.h.b16 %v461
        %v790 = vunpack.c.h.b16 %v462
        %v791 = vunpack.c.h.b16 %v463
        %v792 = vunpack.c.h.b16 %v464
        %v793 = vunpack.c.h.b16 %v465
        %v794 = vunpack.c.l.b16 %v466
        %v795 = vunpack.c.l.b16 %v467
        %v796 = vunpack.c.l.b16 %v468
        %v797 = vunpack.c.l.b16 %v469
        %v798 = vunpack.c.l.b16 %v470
        %v799 = vunpack.c.l.b16 %v471
        %v800 = vunpack.c.l.b16 %v472
        %v801 = vunpack.c.l.b16 %v473
        %v802 = vunpack.c.h.b16 %v466
        %v803 = vunpack.c.h.b16 %v467
        %v804 = vunpack.c.h.b16 %v468
        %v805 = vunpack.c.h.b16 %v469
        %v806 = vunpack.c.h.b16 %v470
        %v807 = vunpack.c.h.b16 %v471
        %v808 = vunpack.c.h.b16 %v472
        %v809 = vunpack.c.h.b16 %v473
        %v810 = vunpack.c.l.b16 %v474
        %v811 = vunpack.c.l.b16 %v475
        %v812 = vunpack.c.l.b16 %v476
        %v813 = vunpack.c.l.b16 %v477
        %v814 = vunpack.c.l.b16 %v478
        %v815 = vunpack.c.l.b16 %v479
        %v816 = vunpack.c.l.b16 %v480
        %v817 = vunpack.c.l.b16 %v481
        %v818 = vunpack.c.h.b16 %v474
        %v819 = vunpack.c.h.b16 %v475
        %v820 = vunpack.c.h.b16 %v476
        %v821 = vunpack.c.h.b16 %v477
        %v822 = vunpack.c.h.b16 %v478
        %v823 = vunpack.c.h.b16 %v479
        %v824 = vunpack.c.h.b16 %v480
        %v825 = vunpack.c.h.b16 %v481
        %v826 = vunpack.c.l.b16 %v482
        %v827 = vunpack.c.l.b16 %v483
        %v828 = vunpack.c.l.b16 %v484
        %v829 = vunpack.c.l.b16 %v485
        %v830 = vunpack.c.l.b16 %v486
        %v831 = vunpack.c.l.b16 %v487
        %v832 = vunpack.c.l.b16 %v488
        %v833 = vunpack.c.l.b16 %v489
        %v834 = vunpack.c.h.b16 %v482
        %v835 = vunpack.c.h.b16 %v483
        %v836 = vunpack.c.h.b16 %v484
        %v837 = vunpack.c.h.b16 %v485
        %v838 = vunpack.c.h.b16 %v486
        %v839 = vunpack.c.h.b16 %v487
        %v840 = vunpack.c.h.b16 %v488
        %v841 = vunpack.c.h.b16 %v489
        %v842 = vunpack.c.l.b16 %v490
        %v843 = vunpack.c.l.b16 %v491
        %v844 = vunpack.c.l.b16 %v492
        %v845 = vunpack.c.l.b16 %v493
        %v846 = vunpack.c.l.b16 %v494
        %v847 = vunpack.c.l.b16 %v495
        %v848 = vunpack.c.l.b16 %v496
        %v849 = vunpack.c.l.b16 %v497
        %v850 = vunpack.c.h.b16 %v490
        %v851 = vunpack.c.h.b16 %v491
        %v852 = vunpack.c.h.b16 %v492
        %v853 = vunpack.c.h.b16 %v493
        %v854 = vunpack.c.h.b16 %v494
        %v855 = vunpack.c.h.b16 %v495
        %v856 = vunpack.c.h.b16 %v496
        %v857 = vunpack.c.h.b16 %v497
        %v858 = vunpack.c.l.b16 %v498
        %v859 = vunpack.c.l.b16 %v499
        %v860 = vunpack.c.l.b16 %v500
        %v861 = vunpack.c.l.b16 %v501
        %v862 = vunpack.c.l.b16 %v502
        %v863 = vunpack.c.l.b16 %v503
        %v864 = vunpack.c.l.b16 %v504
        %v865 = vunpack.c.l.b16 %v505
        %v866 = vunpack.c.h.b16 %v498
        %v867 = vunpack.c.h.b16 %v499
        %v868 = vunpack.c.h.b16 %v500
        %v869 = vunpack.c.h.b16 %v501
        %v870 = vunpack.c.h.b16 %v502
        %v871 = vunpack.c.h.b16 %v503
        %v872 = vunpack.c.h.b16 %v504
        %v873 = vunpack.c.h.b16 %v505
        %v874 = vunpack.c.l.b16 %v506
        %v875 = vunpack.c.l.b16 %v507
        %v876 = vunpack.c.l.b16 %v508
        %v877 = vunpack.c.l.b16 %v509
        %v878 = vunpack.c.l.b16 %v510
        %v879 = vunpack.c.l.b16 %v511
        %v880 = vunpack.c.l.b16 %v512
        %v881 = vunpack.c.l.b16 %v513
        %v882 = vunpack.c.h.b16 %v506
        %v883 = vunpack.c.h.b16 %v507
        %v884 = vunpack.c.h.b16 %v508
        %v885 = vunpack.c.h.b16 %v509
        %v886 = vunpack.c.h.b16 %v510
        %v887 = vunpack.c.h.b16 %v511
        %v888 = vunpack.c.h.b16 %v512
        %v889 = vunpack.c.h.b16 %v513
        %v890 = vunpack.c.l.b16 %v514
        %v891 = vunpack.c.l.b16 %v515
        %v892 = vunpack.c.l.b16 %v516
        %v893 = vunpack.c.l.b16 %v517
        %v894 = vunpack.c.l.b16 %v518
        %v895 = vunpack.c.l.b16 %v519
        %v896 = vunpack.c.l.b16 %v520
        %v897 = vunpack.c.l.b16 %v521
        %v898 = vunpack.c.h.b16 %v514
        %v899 = vunpack.c.h.b16 %v515
        %v900 = vunpack.c.h.b16 %v516
        %v901 = vunpack.c.h.b16 %v517
        %v902 = vunpack.c.h.b16 %v518
        %v903 = vunpack.c.h.b16 %v519
        %v904 = vunpack.c.h.b16 %v520
        %v905 = vunpack.c.h.b16 %v521
        %v906 = vpack.c.b16 %v651, %v650
        %v907 = vpack.c.b16 %v653, %v652
        %v908 = vpack.c.b16 %v655, %v654
        %v909 = vpack.c.b16 %v657, %v656
        %v910 = vpack.c.b16 %v659, %v658
        %v911 = vpack.c.b16 %v661, %v660
        %v912 = vpack.c.b16 %v663, %v662
        %v913 = vpack.c.b16 %v665, %v664
        %v914 = vpack.c.b16 %v667, %v666
        %v915 = vpack.c.b16 %v669, %v668
        %v916 = vpack.c.b16 %v671, %v670
        %v917 = vpack.c.b16 %v673, %v672
        %v918 = vpack.c.b16 %v675, %v674
        %v919 = vpack.c.b16 %v677, %v676
        %v920 = vpack.c.b16 %v679, %v678
        %v921 = vpack.c.b16 %v681, %v680
        %v922 = vpack.c.b16 %v683, %v682
        %v923 = vpack.c.b16 %v685, %v684
        %v924 = vpack.c.b16 %v687, %v686
        %v925 = vpack.c.b16 %v689, %v688
        %v926 = vpack.c.b16 %v691, %v690
        %v927 = vpack.c.b16 %v693, %v692
        %v928 = vpack.c.b16 %v695, %v694
        %v929 = vpack.c.b16 %v697, %v696
        %v930 = vpack.c.b16 %v699, %v698
        %v931 = vpack.c.b16 %v701, %v700
        %v932 = vpack.c.b16 %v703, %v702
        %v933 = vpack.c.b16 %v705, %v704
        %v934 = vpack.c.b16 %v707, %v706
        %v935 = vpack.c.b16 %v709, %v708
        %v936 = vpack.c.b16 %v711, %v710
        %v937 = vpack.c.b16 %v713, %v712
        %v938 = vpack.c.b16 %v715, %v714
        %v939 = vpack.c.b16 %v717, %v716
        %v940 = vpack.c.b16 %v719, %v718
        %v941 = vpack.c.b16 %v721, %v720
        %v942 = vpack.c.b16 %v723, %v722
        %v943 = vpack.c.b16 %v725, %v724
        %v944 = vpack.c.b16 %v727, %v726
        %v945 = vpack.c.b16 %v729, %v728
        %v946 = vpack.c.b16 %v731, %v730
        %v947 = vpack.c.b16 %v733, %v732
        %v948 = vpack.c.b16 %v735, %v734
        %v949 = vpack.c.b16 %v737, %v736
        %v950 = vpack.c.b16 %v739, %v738
        %v951 = vpack.c.b16 %v741, %v740
        %v952 = vpack.c.b16 %v743, %v742
        %v953 = vpack.c.b16 %v745, %v744
        %v954 = vpack.c.b16 %v747, %v746
        %v955 = vpack.c.b16 %v749, %v748
        %v956 = vpack.c.b16 %v751, %v750
        %v957 = vpack.c.b16 %v753, %v752
        %v958 = vpack.c.b16 %v755, %v754
        %v959 = vpack.c.b16 %v757, %v756
        %v960 = vpack.c.b16 %v759, %v758
        %v961 = vpack.c.b16 %v761, %v760
        %v962 = vpack.c.b16 %v763, %v762
        %v963 = vpack.c.b16 %v765, %v764
        %v964 = vpack.c.b16 %v767, %v766
        %v965 = vpack.c.b16 %v769, %v768
        %v966 = vpack.c.b16 %v771, %v770
        %v967 = vpack.c.b16 %v773, %v772
        %v968 = vpack.c.b16 %v775, %v774
        %v969 = vpack.c.b16 %v777, %v776
        %v970 = vpack.c.b16 %v779, %v778
        %v971 = vpack.c.b16 %v781, %v780
        %v972 = vpack.c.b16 %v783, %v782
        %v973 = vpack.c.b16 %v785, %v784
        %v974 = vpack.c.b16 %v787, %v786
        %v975 = vpack.c.b16 %v789, %v788
        %v976 = vpack.c.b16 %v791, %v790
        %v977 = vpack.c.b16 %v793, %v792
        %v978 = vpack.c.b16 %v795, %v794
        %v979 = vpack.c.b16 %v797, %v796
        %v980 = vpack.c.b16 %v799, %v798
        %v981 = vpack.c.b16 %v801, %v800
        %v982 = vpack.c.b16 %v803, %v802
        %v983 = vpack.c.b16 %v805, %v804
        %v984 = vpack.c.b16 %v807, %v806
        %v985 = vpack.c.b16 %v809, %v808
        %v986 = vpack.c.b16 %v811, %v810
        %v987 = vpack.c.b16 %v813, %v812
        %v988 = vpack.c.b16 %v815, %v814
        %v989 = vpack.c.b16 %v817, %v816
        %v990 = vpack.c.b16 %v819, %v818
        %v991 = vpack.c.b16 %v821, %v820
        %v992 = vpack.c.b16 %v823, %v822
        %v993 = vpack.c.b16 %v825, %v824
        %v994 = vpack.c.b16 %v827, %v826
        %v995 = vpack.c.b16 %v829, %v828
        %v996 = vpack.c.b16 %v831, %v830
        %v997 = vpack.c.b16 %v833, %v832
        %v998 = vpack.c.b16 %v835, %v834
        %v999 = vpack.c.b16 %v837, %v836
        %v1000 = vpack.c.b16 %v839, %v838
        %v1001 = vpack.c.b16 %v841, %v840
        %v1002 = vpack.c.b16 %v843, %v842
        %v1003 = vpack.c.b16 %v845, %v844
        %v1004 = vpack.c.b16 %v847, %v846
        %v1005 = vpack.c.b16 %v849, %v848
        %v1006 = vpack.c.b16 %v851, %v850
        %v1007 = vpack.c.b16 %v853, %v852
        %v1008 = vpack.c.b16 %v855, %v854
        %v1009 = vpack.c.b16 %v857, %v856
        %v1010 = vpack.c.b16 %v859, %v858
        %v1011 = vpack.c.b16 %v861, %v860
        %v1012 = vpack.c.b16 %v863, %v862
        %v1013 = vpack.c.b16 %v865, %v864
        %v1014 = vpack.c.b16 %v867, %v866
        %v1015 = vpack.c.b16 %v869, %v868
        %v1016 = vpack.c.b16 %v871, %v870
        %v1017 = vpack.c.b16 %v873, %v872
        %v1018 = vpack.c.b16 %v875, %v874
        %v1019 = vpack.c.b16 %v877, %v876
        %v1020 = vpack.c.b16 %v879, %v878
        %v1021 = vpack.c.b16 %v881, %v880
        %v1022 = vpack.c.b16 %v883, %v882
        %v1023 = vpack.c.b16 %v885, %v884
        %v1024 = vpack.c.b16 %v887, %v886
        %v1025 = vpack.c.b16 %v889, %v888
        %v1026 = vpack.c.b16 %v891, %v890
        %v1027 = vpack.c.b16 %v893, %v892
        %v1028 = vpack.c.b16 %v895, %v894
        %v1029 = vpack.c.b16 %v897, %v896
        %v1030 = vpack.c.b16 %v899, %v898
        %v1031 = vpack.c.b16 %v901, %v900
        %v1032 = vpack.c.b16 %v903, %v902
        %v1033 = vpack.c.b16 %v905, %v904
        %1162 = vst [vmem:[%s135] sm:$0xff] %v906
        %1163 = vst [vmem:[%s135 + $0x8] sm:$0xff] %v907
        %1164 = vst [vmem:[%s135 + $0x10] sm:$0xff] %v908
        %1165 = vst [vmem:[%s135 + $0x18] sm:$0xff] %v909
        %1166 = vst [vmem:[%s135 + $0x20] sm:$0xff] %v910
        %1167 = vst [vmem:[%s135 + $0x28] sm:$0xff] %v911
        %1168 = vst [vmem:[%s135 + $0x30] sm:$0xff] %v912
        %1169 = vst [vmem:[%s135 + $0x38] sm:$0xff] %v913
        %1170 = vst [vmem:[%s135 + $0x40] sm:$0xff] %v914
        %1171 = vst [vmem:[%s135 + $0x48] sm:$0xff] %v915
        %1172 = vst [vmem:[%s135 + $0x50] sm:$0xff] %v916
        %1173 = vst [vmem:[%s135 + $0x58] sm:$0xff] %v917
        %1174 = vst [vmem:[%s135 + $0x60] sm:$0xff] %v918
        %1175 = vst [vmem:[%s135 + $0x68] sm:$0xff] %v919
        %1176 = vst [vmem:[%s135 + $0x70] sm:$0xff] %v920
        %1177 = vst [vmem:[%s135 + $0x78] sm:$0xff] %v921
        %1178 = vst [vmem:[%s135 + $0x80] sm:$0xff] %v922
        %1179 = vst [vmem:[%s135 + $0x88] sm:$0xff] %v923
        %1180 = vst [vmem:[%s135 + $0x90] sm:$0xff] %v924
        %1181 = vst [vmem:[%s135 + $0x98] sm:$0xff] %v925
        %1182 = vst [vmem:[%s135 + $0xa0] sm:$0xff] %v926
        %1183 = vst [vmem:[%s135 + $0xa8] sm:$0xff] %v927
        %1184 = vst [vmem:[%s135 + $0xb0] sm:$0xff] %v928
        %1185 = vst [vmem:[%s135 + $0xb8] sm:$0xff] %v929
        %1186 = vst [vmem:[%s135 + $0xc0] sm:$0xff] %v930
        %1187 = vst [vmem:[%s135 + $0xc8] sm:$0xff] %v931
        %1188 = vst [vmem:[%s135 + $0xd0] sm:$0xff] %v932
        %1189 = vst [vmem:[%s135 + $0xd8] sm:$0xff] %v933
        %1190 = vst [vmem:[%s135 + $0xe0] sm:$0xff] %v934
        %1191 = vst [vmem:[%s135 + $0xe8] sm:$0xff] %v935
        %1192 = vst [vmem:[%s135 + $0xf0] sm:$0xff] %v936
        %1193 = vst [vmem:[%s135 + $0xf8] sm:$0xff] %v937
        %1194 = vst [vmem:[%s135 + $0x100] sm:$0xff] %v938
        %1195 = vst [vmem:[%s135 + $0x108] sm:$0xff] %v939
        %1196 = vst [vmem:[%s135 + $0x110] sm:$0xff] %v940
        %1197 = vst [vmem:[%s135 + $0x118] sm:$0xff] %v941
        %1198 = vst [vmem:[%s135 + $0x120] sm:$0xff] %v942
        %1199 = vst [vmem:[%s135 + $0x128] sm:$0xff] %v943
        %1200 = vst [vmem:[%s135 + $0x130] sm:$0xff] %v944
        %1201 = vst [vmem:[%s135 + $0x138] sm:$0xff] %v945
        %1202 = vst [vmem:[%s135 + $0x140] sm:$0xff] %v946
        %1203 = vst [vmem:[%s135 + $0x148] sm:$0xff] %v947
        %1204 = vst [vmem:[%s135 + $0x150] sm:$0xff] %v948
        %1205 = vst [vmem:[%s135 + $0x158] sm:$0xff] %v949
        %1206 = vst [vmem:[%s135 + $0x160] sm:$0xff] %v950
        %1207 = vst [vmem:[%s135 + $0x168] sm:$0xff] %v951
        %1208 = vst [vmem:[%s135 + $0x170] sm:$0xff] %v952
        %1209 = vst [vmem:[%s135 + $0x178] sm:$0xff] %v953
        %1210 = vst [vmem:[%s135 + $0x180] sm:$0xff] %v954
        %1211 = vst [vmem:[%s135 + $0x188] sm:$0xff] %v955
        %1212 = vst [vmem:[%s135 + $0x190] sm:$0xff] %v956
        %1213 = vst [vmem:[%s135 + $0x198] sm:$0xff] %v957
        %1214 = vst [vmem:[%s135 + $0x1a0] sm:$0xff] %v958
        %1215 = vst [vmem:[%s135 + $0x1a8] sm:$0xff] %v959
        %1216 = vst [vmem:[%s135 + $0x1b0] sm:$0xff] %v960
        %1217 = vst [vmem:[%s135 + $0x1b8] sm:$0xff] %v961
        %1218 = vst [vmem:[%s135 + $0x1c0] sm:$0xff] %v962
        %1219 = vst [vmem:[%s135 + $0x1c8] sm:$0xff] %v963
        %1220 = vst [vmem:[%s135 + $0x1d0] sm:$0xff] %v964
        %1221 = vst [vmem:[%s135 + $0x1d8] sm:$0xff] %v965
        %1222 = vst [vmem:[%s135 + $0x1e0] sm:$0xff] %v966
        %1223 = vst [vmem:[%s135 + $0x1e8] sm:$0xff] %v967
        %1224 = vst [vmem:[%s135 + $0x1f0] sm:$0xff] %v968
        %1225 = vst [vmem:[%s135 + $0x1f8] sm:$0xff] %v969
        %1226 = vst [vmem:[%s135 + $0x200] sm:$0xff] %v970
        %1227 = vst [vmem:[%s135 + $0x208] sm:$0xff] %v971
        %1228 = vst [vmem:[%s135 + $0x210] sm:$0xff] %v972
        %1229 = vst [vmem:[%s135 + $0x218] sm:$0xff] %v973
        %1230 = vst [vmem:[%s135 + $0x220] sm:$0xff] %v974
        %1231 = vst [vmem:[%s135 + $0x228] sm:$0xff] %v975
        %1232 = vst [vmem:[%s135 + $0x230] sm:$0xff] %v976
        %1233 = vst [vmem:[%s135 + $0x238] sm:$0xff] %v977
        %1234 = vst [vmem:[%s135 + $0x240] sm:$0xff] %v978
        %1235 = vst [vmem:[%s135 + $0x248] sm:$0xff] %v979
        %1236 = vst [vmem:[%s135 + $0x250] sm:$0xff] %v980
        %1237 = vst [vmem:[%s135 + $0x258] sm:$0xff] %v981
        %1238 = vst [vmem:[%s135 + $0x260] sm:$0xff] %v982
        %1239 = vst [vmem:[%s135 + $0x268] sm:$0xff] %v983
        %1240 = vst [vmem:[%s135 + $0x270] sm:$0xff] %v984
        %1241 = vst [vmem:[%s135 + $0x278] sm:$0xff] %v985
        %1242 = vst [vmem:[%s135 + $0x280] sm:$0xff] %v986
        %1243 = vst [vmem:[%s135 + $0x288] sm:$0xff] %v987
        %1244 = vst [vmem:[%s135 + $0x290] sm:$0xff] %v988
        %1245 = vst [vmem:[%s135 + $0x298] sm:$0xff] %v989
        %1246 = vst [vmem:[%s135 + $0x2a0] sm:$0xff] %v990
        %1247 = vst [vmem:[%s135 + $0x2a8] sm:$0xff] %v991
        %1248 = vst [vmem:[%s135 + $0x2b0] sm:$0xff] %v992
        %1249 = vst [vmem:[%s135 + $0x2b8] sm:$0xff] %v993
        %1250 = vst [vmem:[%s135 + $0x2c0] sm:$0xff] %v994
        %1251 = vst [vmem:[%s135 + $0x2c8] sm:$0xff] %v995
        %1252 = vst [vmem:[%s135 + $0x2d0] sm:$0xff] %v996
        %1253 = vst [vmem:[%s135 + $0x2d8] sm:$0xff] %v997
        %1254 = vst [vmem:[%s135 + $0x2e0] sm:$0xff] %v998
        %1255 = vst [vmem:[%s135 + $0x2e8] sm:$0xff] %v999
        %1256 = vst [vmem:[%s135 + $0x2f0] sm:$0xff] %v1000
        %1257 = vst [vmem:[%s135 + $0x2f8] sm:$0xff] %v1001
        %1258 = vst [vmem:[%s135 + $0x300] sm:$0xff] %v1002
        %1259 = vst [vmem:[%s135 + $0x308] sm:$0xff] %v1003
        %1260 = vst [vmem:[%s135 + $0x310] sm:$0xff] %v1004
        %1261 = vst [vmem:[%s135 + $0x318] sm:$0xff] %v1005
        %1262 = vst [vmem:[%s135 + $0x320] sm:$0xff] %v1006
        %1263 = vst [vmem:[%s135 + $0x328] sm:$0xff] %v1007
        %1264 = vst [vmem:[%s135 + $0x330] sm:$0xff] %v1008
        %1265 = vst [vmem:[%s135 + $0x338] sm:$0xff] %v1009
        %1266 = vst [vmem:[%s135 + $0x340] sm:$0xff] %v1010
        %1267 = vst [vmem:[%s135 + $0x348] sm:$0xff] %v1011
        %1268 = vst [vmem:[%s135 + $0x350] sm:$0xff] %v1012
        %1269 = vst [vmem:[%s135 + $0x358] sm:$0xff] %v1013
        %1270 = vst [vmem:[%s135 + $0x360] sm:$0xff] %v1014
        %1271 = vst [vmem:[%s135 + $0x368] sm:$0xff] %v1015
        %1272 = vst [vmem:[%s135 + $0x370] sm:$0xff] %v1016
        %1273 = vst [vmem:[%s135 + $0x378] sm:$0xff] %v1017
        %1274 = vst [vmem:[%s135 + $0x380] sm:$0xff] %v1018
        %1275 = vst [vmem:[%s135 + $0x388] sm:$0xff] %v1019
        %1276 = vst [vmem:[%s135 + $0x390] sm:$0xff] %v1020
        %1277 = vst [vmem:[%s135 + $0x398] sm:$0xff] %v1021
        %1278 = vst [vmem:[%s135 + $0x3a0] sm:$0xff] %v1022
        %1279 = vst [vmem:[%s135 + $0x3a8] sm:$0xff] %v1023
        %1280 = vst [vmem:[%s135 + $0x3b0] sm:$0xff] %v1024
        %1281 = vst [vmem:[%s135 + $0x3b8] sm:$0xff] %v1025
        %1282 = vst [vmem:[%s135 + $0x3c0] sm:$0xff] %v1026
        %1283 = vst [vmem:[%s135 + $0x3c8] sm:$0xff] %v1027
        %1284 = vst [vmem:[%s135 + $0x3d0] sm:$0xff] %v1028
        %1285 = vst [vmem:[%s135 + $0x3d8] sm:$0xff] %v1029
        %1286 = vst [vmem:[%s135 + $0x3e0] sm:$0xff] %v1030
        %1287 = vst [vmem:[%s135 + $0x3e8] sm:$0xff] %v1031
        %1288 = vst [vmem:[%s135 + $0x3f0] sm:$0xff] %v1032
        %1289 = vst [vmem:[%s135 + $0x3f8] sm:$0xff] %v1033
        %s1290 = sand.u32 %s52, 1
        %s1291 = scalar_lea.sflag [#allocation4], %s1290
        %s1292 = sand.u32 %s52, 1
        %s1293 = smul.addr %s1292, 1024
        %s1294 = scalar_lea.vmem [#allocation5], %s1293
        // Predicated region
        $region29: #{tpu_custom_call.1} parent=23 // pred_check
          %p1295 = pneg %p62
        $region30: #{tpu_custom_call.1} parent=23 // pred_check_branch
          %1297 = sbr.rel (%p1295) target = $region32
        $region31: #{tpu_custom_call.1} parent=23 // pred_region
          %s1298 = smul.u32 32, %s18
          %s1300 = ssub.s32 16384, 16384
          %1301 = vsyncadd %s1291, %s1300
          %s1302 = smul.addr %s1298, 8
          %s1303 = smul.addr %s1302, 64
          %s1304 = scalar_lea.hbm %s1, %s1303
          %s1305 = sshll.u32 %s1294, 4
          %s1306 = int_to_ptr.vmem [resolvable:$true] %s1305
          %1311 = dma.vmem_to_hbm [thread:$0]  %s1306, 16384, %s1304, %s1291, 512, 512, 32
        $region32: #{tpu_custom_call.1} parent=23 // pred_fallthru
          _
      $region24: #{tpu_custom_call.1} parent=5 // pred_fallthru
        _
      %p1312 = scmp.le.s32.totalorder 2, %s13
      // Predicated region
      $region33: #{tpu_custom_call.1} parent=5 // pred_check
        %p1313 = pneg %p1312
      $region34: #{tpu_custom_call.1} parent=5 // pred_check_branch
        %1315 = sbr.rel (%p1313) target = $region36
      $region35: #{tpu_custom_call.1} parent=5 // pred_region
        %s1316 = ssub.s32 %s13, 2
        // Predicated region
        $region37: #{tpu_custom_call.1} parent=35 // pred_check
          %p1317 = pneg %p68
        $region38: #{tpu_custom_call.1} parent=35 // pred_check_branch
          %1319 = sbr.rel (%p1317) target = $region40
        $region39: #{tpu_custom_call.1} parent=35 // pred_region
          %s1320 = sand.u32 %s53, 1
          %s1321 = scalar_lea.sflag [#allocation4], %s1320
          %s1322 = sand.u32 %s53, 1
          %s1323 = smul.addr %s1322, 1024
          %s1324 = scalar_lea.vmem [#allocation5], %s1323
          %1325 = dma.done %s1321, 16384
        $region40: #{tpu_custom_call.1} parent=35 // pred_fallthru
          _
      $region36: #{tpu_custom_call.1} parent=5 // pred_fallthru
        _
    $region6: #{tpu_custom_call.1} parent=1 // loop_footer
      %s17 = sadd.s32 1, %s13
    $region7: #{tpu_custom_call.1} parent=1 // loop_footer_branch
      %12 = sbr.rel target = $region3
    $region8: #{tpu_custom_call.1} parent=1 // loop_exit
      _
    %1326 = vsyncpa [#allocation3], 1
    %s1327 = scalar_lea.sflag [#allocation3], 1
    %1328 = vsyncpa %s1327, 1
    %1329 = vsyncpa [#allocation4], 1
    %s1330 = scalar_lea.sflag [#allocation4], 1
    %1331 = vsyncpa %s1330, 1

</llo_original>
